<compile_context>
chip_gen: v7x
topology: tpu7x:2x2x1
jax: 0.10.0
libtpu: 0.0.40
codegen_flags: <defaults>
</compile_context>

<pallas_src>
import functools

import jax
import jax.numpy as jnp
from jax.experimental import pallas as pl
from jax.experimental.pallas import tpu as pltpu

LANES = 128
SUBLANES = 8
DEFAULT_BLOCK_ROWS = 4096            # (4096, 128) f32 = 2 MiB per input tile


def _focal_loss_kernel(x_ref, t_ref, out_ref, acc_ref, *, gamma,
                       blocks_total, blocks_per_core, ragged_rows, num_surplus):
    c = pl.program_id(0)             # per-core partial-sum axis ("parallel")
    k = pl.program_id(1)             # reduction axis ("arbitrary")
    blk = c * blocks_per_core + k    # logical block index (pre-clamp)

    @pl.when(k == 0)
    def _():
        acc_ref[...] = jnp.zeros_like(acc_ref)

    def tile_loss_sum(valid_rows):
        p = x_ref[...].astype(jnp.float32)        # bf16 -> f32 upcast (no-op for f32)
        t = t_ref[...]
        if t.dtype != jnp.int32:                  # int8/int16: unpack once, compare in f32 layout
            t = t.astype(jnp.float32)
        pe = jnp.where(t > 0, p, 1.0 - p)         # exact for binary {0,1} labels
        loss = (1.0 - pe) ** gamma * jnp.log(pe)  # integer_pow + single EUP log
        if valid_rows is not None:                # cold path only: ragged last block
            row = jax.lax.broadcasted_iota(jnp.int32, loss.shape, 0)
            loss = jnp.where(row < valid_rows, loss, 0.0)   # select drops garbage/NaN
        # Row-group reduce: pure VPU vreg adds into the (8,128) accumulator.
        return loss.reshape(-1, SUBLANES, LANES).sum(axis=0)

    n_full = blocks_total - 1 if ragged_rows else blocks_total

    if ragged_rows or num_surplus:
        # Scalar guard only; the full-tile path itself carries no mask.
        @pl.when(blk < n_full)
        def _():
            acc_ref[...] += tile_loss_sum(None)
    else:
        acc_ref[...] += tile_loss_sum(None)

    if ragged_rows:
        @pl.when(blk == blocks_total - 1)
        def _():
            acc_ref[...] += tile_loss_sum(ragged_rows)

    @pl.when(k == pl.num_programs(1) - 1)
    def _():
        # One cross-sublane reduce per core -> lane-dense (1,128) partial output.
        out_ref[...] = jnp.sum(acc_ref[...], axis=0, keepdims=True)


def _binary_focal_sum(p, t, gamma):
    """Plain-JAX sum of the binary-label focal-loss terms (tail / tiny inputs)."""
    p = p.astype(jnp.float32)
    pe = jnp.where(t > 0, p, 1.0 - p)
    return jnp.sum((1.0 - pe) ** gamma * jnp.log(pe))


def focal_loss(x, target, gamma=5, block_rows=DEFAULT_BLOCK_ROWS,
               num_cores=1, core_parallel=False):
    """Pallas equivalent of FocalLoss(gamma).forward(x, target).

    x:      [N] float32 or bfloat16 probabilities in (0, 1).
    target: [N] integer / bool labels, assumed binary {0, 1} (as the module uses).
    gamma:  python int so `** gamma` lowers to integer_pow.

    v7x tuning: focal_loss(x, t, block_rows=8192, num_cores=2, core_parallel=True).
    v5e/v6e (single TensorCore): defaults (num_cores=1) avoid any surplus re-read.
    """
    x = jnp.asarray(x)
    target = jnp.asarray(target)
    assert isinstance(gamma, int), "keep gamma an int so ** lowers to integer_pow"
    assert x.ndim == 1 and target.ndim == 1 and x.shape == target.shape
    assert jnp.issubdtype(target.dtype, jnp.integer) or target.dtype == jnp.bool_, (
        "FocalLoss kernel assumes binary integer/bool labels")
    n = x.shape[0]
    assert n > 0

    # Keep HBM streams as narrow as the caller provides them.
    if x.dtype != jnp.float32 and x.dtype != jnp.bfloat16:
        x = x.astype(jnp.float32)
    if target.dtype == jnp.bool_:
        target = target.astype(jnp.int8)
    elif target.dtype.itemsize > 4:            # Pallas TPU: keep labels <= 32-bit
        target = target.astype(jnp.int32)

    # Sublane alignment implied by the narrowest streamed dtype.
    sub_align = SUBLANES
    if x.dtype == jnp.bfloat16:
        sub_align = max(sub_align, 16)
    if target.dtype.itemsize == 1:
        sub_align = max(sub_align, 32)
    elif target.dtype.itemsize == 2:
        sub_align = max(sub_align, 16)
    block_rows = max(sub_align, (block_rows // sub_align) * sub_align)

    rows = n // LANES
    total = jnp.float32(0.0)
    split = 0

    if rows >= sub_align:
        split = rows * LANES                   # lane-aligned prefix -> kernel
        block_rows = min(block_rows, (rows // sub_align) * sub_align)
        blocks_total = -(-rows // block_rows)
        ragged_rows = rows % block_rows
        num_cores = max(1, min(num_cores, blocks_total))
        blocks_per_core = -(-blocks_total // num_cores)
        num_surplus = num_cores * blocks_per_core - blocks_total

        # Free bitcast when N is lane-aligned; otherwise a single prefix slice
        # (the <128-element remainder is summed in plain JAX below).
        x2 = (x if split == n else x[:split]).reshape(rows, LANES)
        t2 = (target if split == n else target[:split]).reshape(rows, LANES)

        def idx_map(c, k):
            # Clamp so a surplus step of the last core re-reads a valid block;
            # its contribution is skipped by the in-kernel scalar guard.
            return (jnp.minimum(c * blocks_per_core + k, blocks_total - 1), 0)

        tile_spec = pl.BlockSpec((block_rows, LANES), idx_map)
        core_sem = pltpu.CORE_PARALLEL if core_parallel else "parallel"

        partials = pl.pallas_call(
            functools.partial(_focal_loss_kernel, gamma=gamma,
                              blocks_total=blocks_total,
                              blocks_per_core=blocks_per_core,
                              ragged_rows=ragged_rows,
                              num_surplus=num_surplus),
            out_shape=jax.ShapeDtypeStruct((1, num_cores * LANES), jnp.float32),
            grid_spec=pltpu.PrefetchScalarGridSpec(
                num_scalar_prefetch=0,
                grid=(num_cores, blocks_per_core),
                in_specs=[tile_spec, tile_spec],
                out_specs=pl.BlockSpec((1, LANES), lambda c, k: (0, c)),
                scratch_shapes=[pltpu.VMEM((SUBLANES, LANES), jnp.float32)],
            ),
            compiler_params=pltpu.CompilerParams(
                dimension_semantics=(core_sem, "arbitrary")),
            # At the defaults (f32 + int32, 4096 rows): <= 8 MiB of double-buffered
            # input tiles, well under every generation's scoped-VMEM default.
        )(x2, t2)
        total = jnp.sum(partials)

    if split < n:
        # Sub-lane / sub-block remainder handled in plain JAX (tiny).
        total = total + _binary_focal_sum(x[split:], target[split:], gamma)

    return -total / jnp.float32(n)


def focal_loss_ref(x, target, gamma=5):
    """Pure-JAX literal transcription of the PyTorch forward."""
    p = x.astype(jnp.float32)
    t = target.astype(jnp.float32)
    src_term = (1.0 - p) ** gamma * jnp.log(p)
    tgt_term = p ** gamma * jnp.log(1.0 - p)
    loss = src_term * t + tgt_term * (1.0 - t)
    return -jnp.mean(loss)


if __name__ == "__main__":
    key = jax.random.PRNGKey(0)
    k1, k2, k3, k4, k5, k6 = jax.random.split(key, 6)

    # Case 1: lane-aligned N, default large tile -> clean hot path (no slice
    # copy, no masked branch, no surplus step).
    n1 = 4096
    x1 = jax.random.uniform(k1, (n1,), jnp.float32, minval=0.01, maxval=0.99)
    t1 = jax.random.bernoulli(k2, 0.5, (n1,)).astype(jnp.int32)
    out1 = jax.block_until_ready(focal_loss(x1, t1, gamma=5))
    ref1 = jax.block_until_ready(focal_loss_ref(x1, t1, gamma=5))
    assert jnp.allclose(out1, ref1, rtol=1e-4, atol=1e-6), (out1, ref1)

    # Case 2: unaligned N (plain-JAX sub-lane tail), tiny blocks -> several grid
    # steps plus a ragged, masked last block.
    n2 = 5000
    x2 = jax.random.uniform(k3, (n2,), jnp.float32, minval=0.01, maxval=0.99)
    t2 = jax.random.bernoulli(k4, 0.5, (n2,)).astype(jnp.int32)
    out2 = jax.block_until_ready(focal_loss(x2, t2, gamma=5, block_rows=8))
    ref2 = jax.block_until_ready(focal_loss_ref(x2, t2, gamma=5))
    assert jnp.allclose(out2, ref2, rtol=1e-4, atol=1e-6), (out2, ref2)

    # Case 3: narrow streams (bf16 probs + int8 labels), two per-core partials
    # with one surplus clamped step (v7x-style grid layout).
    n3 = 13 * 32 * LANES
    x3 = jax.random.uniform(k5, (n3,), jnp.bfloat16, minval=0.05, maxval=0.95)
    t3 = jax.random.bernoulli(k6, 0.5, (n3,)).astype(jnp.int8)
    out3 = jax.block_until_ready(
        focal_loss(x3, t3, gamma=2, block_rows=32, num_cores=2))
    ref3 = jax.block_until_ready(
        focal_loss_ref(x3.astype(jnp.float32), t3, gamma=2))
    assert jnp.allclose(out3, ref3, rtol=1e-4, atol=1e-6), (out3, ref3)

    print("KERNEL_OK")
</pallas_src>

<mosaic_0001>
module attributes {stable_mosaic.version = 11 : i64} {
  func.func @_focal_loss_kernel(%arg0: i32, %arg1: i32, %arg2: memref<32x128xf32, #tpu.memory_space<vmem>>, %arg3: memref<32x128xi32, #tpu.memory_space<vmem>>, %arg4: memref<1x128xf32, #tpu.memory_space<vmem>>, %arg5: memref<8x128xf32, #tpu.memory_space<vmem>>) attributes {dimension_semantics = [#tpu.dimension_semantics<parallel>, #tpu.dimension_semantics<arbitrary>], iteration_bounds = array<i64: 1, 1>, scalar_prefetch = 0 : i64, scratch_operands = 1 : i64, tpu.core_type = #tpu.core_type<tc>, window_params = [{transform_indices = @transform_0, window_bounds = array<i64: 32, 128>}, {transform_indices = @transform_1, window_bounds = array<i64: 32, 128>}, {transform_indices = @transform_2, window_bounds = array<i64: 1, 128>}]} {
    %c0_i32 = arith.constant 0 : i32
    %0 = arith.cmpi eq, %arg1, %c0_i32 : i32
    %1 = arith.extui %0 : i1 to i32
    %c0_i32_0 = arith.constant 0 : i32
    %2 = arith.cmpi ne, %1, %c0_i32_0 : i32
    scf.if %2 {
      %cst_13 = arith.constant 0.000000e+00 : f32
      %25 = vector.broadcast %cst_13 : f32 to vector<8x128xf32>
      %c0_14 = arith.constant 0 : index
      %c0_15 = arith.constant 0 : index
      %26 = vector.load %arg5[%c0_14, %c0_15] : memref<8x128xf32, #tpu.memory_space<vmem>>, vector<8x128xf32>
      tpu.vector_store %arg5[%c0_14, %c0_15], %25 {strides = array<i32>} : memref<8x128xf32, #tpu.memory_space<vmem>>, vector<8x128xf32>,
    } else {
    }
    %c0 = arith.constant 0 : index
    %c0_1 = arith.constant 0 : index
    %3 = vector.load %arg5[%c0, %c0_1] : memref<8x128xf32, #tpu.memory_space<vmem>>, vector<8x128xf32>
    %c0_2 = arith.constant 0 : index
    %c0_3 = arith.constant 0 : index
    %4 = vector.load %arg2[%c0_2, %c0_3] : memref<32x128xf32, #tpu.memory_space<vmem>>, vector<32x128xf32>
    %c0_4 = arith.constant 0 : index
    %c0_5 = arith.constant 0 : index
    %5 = vector.load %arg3[%c0_4, %c0_5] : memref<32x128xi32, #tpu.memory_space<vmem>>, vector<32x128xi32>
    %c0_i32_6 = arith.constant 0 : i32
    %6 = vector.broadcast %c0_i32_6 : i32 to vector<32x128xi32>
    %7 = arith.cmpi sgt, %5, %6 : vector<32x128xi32>
    %cst = arith.constant 1.000000e+00 : f32
    %8 = vector.broadcast %cst : f32 to vector<32x128xf32>
    %9 = arith.subf %8, %4 : vector<32x128xf32>
    %10 = arith.select %7, %4, %9 : vector<32x128xi1>, vector<32x128xf32>
    %cst_7 = arith.constant 1.000000e+00 : f32
    %11 = vector.broadcast %cst_7 : f32 to vector<32x128xf32>
    %12 = arith.subf %11, %10 : vector<32x128xf32>
    %13 = arith.mulf %12, %12 : vector<32x128xf32>
    %14 = arith.mulf %13, %13 : vector<32x128xf32>
    %15 = arith.mulf %12, %14 : vector<32x128xf32>
    %16 = math.log %10 : vector<32x128xf32>
    %17 = arith.mulf %15, %16 : vector<32x128xf32>
    %18 = vector.shape_cast %17 : vector<32x128xf32> to vector<4x8x128xf32>
    %cst_8 = arith.constant dense<0.000000e+00> : vector<8x128xf32>
    %19 = vector.multi_reduction <add>, %18, %cst_8 [0] : vector<4x8x128xf32> to vector<8x128xf32>
    %20 = arith.addf %3, %19 : vector<8x128xf32>
    %c0_9 = arith.constant 0 : index
    %c0_10 = arith.constant 0 : index
    %21 = vector.load %arg5[%c0_9, %c0_10] : memref<8x128xf32, #tpu.memory_space<vmem>>, vector<8x128xf32>
    tpu.vector_store %arg5[%c0_9, %c0_10], %20 {strides = array<i32>} : memref<8x128xf32, #tpu.memory_space<vmem>>, vector<8x128xf32>,
    %c0_i32_11 = arith.constant 0 : i32
    %22 = arith.cmpi eq, %arg1, %c0_i32_11 : i32
    %23 = arith.extui %22 : i1 to i32
    %c0_i32_12 = arith.constant 0 : i32
    %24 = arith.cmpi ne, %23, %c0_i32_12 : i32
    scf.if %24 {
      %c0_13 = arith.constant 0 : index
      %c0_14 = arith.constant 0 : index
      %25 = vector.load %arg5[%c0_13, %c0_14] : memref<8x128xf32, #tpu.memory_space<vmem>>, vector<8x128xf32>
      %cst_15 = arith.constant dense<0.000000e+00> : vector<128xf32>
      %26 = vector.multi_reduction <add>, %25, %cst_15 [0] : vector<8x128xf32> to vector<128xf32>
      %27 = vector.shape_cast %26 : vector<128xf32> to vector<1x128xf32>
      %c0_16 = arith.constant 0 : index
      %c0_17 = arith.constant 0 : index
      %28 = vector.load %arg4[%c0_16, %c0_17] : memref<1x128xf32, #tpu.memory_space<vmem>>, vector<1x128xf32>
      tpu.vector_store %arg4[%c0_16, %c0_17], %27 {strides = array<i32>} : memref<1x128xf32, #tpu.memory_space<vmem>>, vector<1x128xf32>,
    } else {
    }
    return
  }
  func.func @transform_0(%arg0: i32, %arg1: i32) -> (i32, i32) {
    %c1_i32 = arith.constant 1 : i32
    %0 = arith.muli %arg0, %c1_i32 : i32
    %1 = arith.addi %0, %arg1 : i32
    %c0_i32 = arith.constant 0 : i32
    %2 = arith.minsi %1, %c0_i32 : i32
    %c0_i32_0 = arith.constant 0 : i32
    %c0_i32_1 = arith.constant 0 : i32
    return %2, %c0_i32_0 : i32, i32
  }
  func.func @transform_1(%arg0: i32, %arg1: i32) -> (i32, i32) {
    %c1_i32 = arith.constant 1 : i32
    %0 = arith.muli %arg0, %c1_i32 : i32
    %1 = arith.addi %0, %arg1 : i32
    %c0_i32 = arith.constant 0 : i32
    %2 = arith.minsi %1, %c0_i32 : i32
    %c0_i32_0 = arith.constant 0 : i32
    %c0_i32_1 = arith.constant 0 : i32
    return %2, %c0_i32_0 : i32, i32
  }
  func.func @transform_2(%arg0: i32, %arg1: i32) -> (i32, i32) {
    %c0_i32 = arith.constant 0 : i32
    %c0_i32_0 = arith.constant 0 : i32
    return %c0_i32, %arg0 : i32, i32
  }
}

</mosaic_0001>

<llo_original>
// kernel: tpu_custom_call.1
$region0: #{tpu_custom_call.1}
  #allocation0 [shape = 'u32[]', space=smem, size = 0x4, offset = 0x4, fixed_abs, tag = 'smem constant byte address 0x4 - core index']
  #allocation1 [shape = 'u32[144,128]{1,0:T(1,128)}', space=vmem, size = 0x12000, scoped, tag = 'internal scratch']
  #allocation2 [shape = 'f32[8,128]{1,0:T(8,128)}', space=vmem, size = 0x1000, scoped, tag = 'scratch operand']
  %s0 = inlined_call_operand.hbm [shape: f32[32,128], index: 0, kind: input, shape index: {}]
  %s1 = inlined_call_operand.hbm [shape: s32[32,128], index: 1, kind: input, shape index: {}]
  %s2 = inlined_call_operand.hbm [shape: f32[1,128], index: 2, kind: output, shape index: {}]
  %s3 = sld [smem:[#allocation0]]
  $region34: #{tpu_custom_call.1} parent=0
    _
  %s5 = ssub.s32 1, %s3
  %s6 = scalar_select 0, %s5, %s3
  $region1: #{tpu_custom_call.1} parent=0
    #allocation3 [shape = 'u8[16384]{0}', space=vmem, size = 0x4000, scoped, tag = 'input window, operand 0, single buffered']
    #allocation4 [shape = 's32[1]{0}', space=sflag, size = 0x4, scoped, tag = 'scoped memory for tpu_custom_call.1']
    #allocation5 [shape = 's32[1]{0}', space=sflag, size = 0x4, scoped, tag = 'scoped memory for tpu_custom_call.1']
    #allocation6 [shape = 'u8[16384]{0}', space=vmem, size = 0x4000, scoped, tag = 'input window, operand 1, single buffered']
    #allocation7 [shape = 's32[1]{0}', space=sflag, size = 0x4, scoped, tag = 'scoped memory for tpu_custom_call.1']
    #allocation8 [shape = 'u8[512]{0}', space=vmem, size = 0x400, scoped, tag = 'output window, operand 0, single buffered']
    %7 = vsyncpa [#allocation4], 0
    %8 = vsyncpa [#allocation7], 0
    %9 = vsyncpa [#allocation5], 0
    // Predicated region
    $region2: #{tpu_custom_call.1} parent=1 // pred_check
      _
    $region3: #{tpu_custom_call.1} parent=1 // pred_check_branch
      %11 = sbr.rel (0) target = $region5
    $region4: #{tpu_custom_call.1} parent=1 // pred_region
      %s12 = sadd.s32 0, 0
      %p13 = scmp.lt.s32.totalorder %s12, 0
      %s14 = scalar_select %p13, %s12, 0
      %s15 = smul.u32 4, %s14
      %s17 = ssub.s32 512, 512
      %18 = vsyncadd [#allocation4], %s17
      %s19 = smul.addr %s15, 128
      %s20 = scalar_lea.hbm %s0, %s19
      %s21 = sshll.u32 [#allocation3], 4
      %s22 = int_to_ptr.vmem [resolvable:$true] %s21
      %27 = dma.hbm_to_vmem [thread:$0]  %s20, 512, %s22, [#allocation4], 128, 128, 8
    $region5: #{tpu_custom_call.1} parent=1 // pred_fallthru
      _
    // Predicated region
    $region6: #{tpu_custom_call.1} parent=1 // pred_check
      _
    $region7: #{tpu_custom_call.1} parent=1 // pred_check_branch
      %29 = sbr.rel (0) target = $region9
    $region8: #{tpu_custom_call.1} parent=1 // pred_region
      %s30 = sadd.s32 0, 0
      %p31 = scmp.lt.s32.totalorder %s30, 0
      %s32 = scalar_select %p31, %s30, 0
      %s33 = smul.u32 4, %s32
      %s35 = ssub.s32 512, 512
      %36 = vsyncadd [#allocation7], %s35
      %s37 = smul.addr %s33, 128
      %s38 = scalar_lea.hbm %s1, %s37
      %s39 = sshll.u32 [#allocation6], 4
      %s40 = int_to_ptr.vmem [resolvable:$true] %s39
      %45 = dma.hbm_to_vmem [thread:$0]  %s38, 512, %s40, [#allocation7], 128, 128, 8
    $region9: #{tpu_custom_call.1} parent=1 // pred_fallthru
      _
    // Predicated region
    $region10: #{tpu_custom_call.1} parent=1 // pred_check
      _
    $region11: #{tpu_custom_call.1} parent=1 // pred_check_branch
      %47 = sbr.rel (0) target = $region13
    $region12: #{tpu_custom_call.1} parent=1 // pred_region
      %48 = dma.done [#allocation4], 512
    $region13: #{tpu_custom_call.1} parent=1 // pred_fallthru
      _
    // Predicated region
    $region14: #{tpu_custom_call.1} parent=1 // pred_check
      _
    $region15: #{tpu_custom_call.1} parent=1 // pred_check_branch
      %50 = sbr.rel (0) target = $region17
    $region16: #{tpu_custom_call.1} parent=1 // pred_region
      %51 = dma.done [#allocation7], 512
    $region17: #{tpu_custom_call.1} parent=1 // pred_fallthru
      _
    %s52 = sadd.s32 0, 0
    %p53 = scmp.lt.s32.totalorder %s52, 0
    %s54 = scalar_select %p53, %s52, 0
    %s55 = smul.u32 4, %s54
    %s56 = sadd.s32 0, 0
    %p57 = scmp.lt.s32.totalorder %s56, 0
    %s58 = scalar_select %p57, %s56, 0
    %s59 = smul.u32 4, %s58
    %p60 = scmp.eq.s32.totalorder 0, 0
    // Predicated region
    $region18: #{tpu_custom_call.1} parent=1 // pred_check
      %p61 = pneg %p60
    $region19: #{tpu_custom_call.1} parent=1 // pred_check_branch
      %63 = sbr.rel (%p61) target = $region21
    $region20: #{tpu_custom_call.1} parent=1 // pred_region
      %64 = vst [vmem:[#allocation2] sm:$0xff] 0.0
    $region21: #{tpu_custom_call.1} parent=1 // pred_fallthru
      _
    %v65 = vld [vmem:[#allocation2] sm:$0xff]
    %v66 = vld [vmem:[#allocation3] sm:$0xff]
    %v67 = vld [vmem:[#allocation3 + $0x8] sm:$0xff]
    %v68 = vld [vmem:[#allocation3 + $0x10] sm:$0xff]
    %v69 = vld [vmem:[#allocation3 + $0x18] sm:$0xff]
    %v70 = vld [vmem:[#allocation6] sm:$0xff]
    %v71 = vld [vmem:[#allocation6 + $0x8] sm:$0xff]
    %v72 = vld [vmem:[#allocation6 + $0x10] sm:$0xff]
    %v73 = vld [vmem:[#allocation6 + $0x18] sm:$0xff]
    %vm74 = vcmp.gt.s32.totalorder %v70, 0
    %vm75 = vcmp.gt.s32.totalorder %v71, 0
    %vm76 = vcmp.gt.s32.totalorder %v72, 0
    %vm77 = vcmp.gt.s32.totalorder %v73, 0
    %v78 = vsub.f32 1.0, %v66
    %v79 = vsub.f32 1.0, %v67
    %v80 = vsub.f32 1.0, %v68
    %v81 = vsub.f32 1.0, %v69
    %v82 = vsel %vm74, %v66, %v78
    %v83 = vsel %vm75, %v67, %v79
    %v84 = vsel %vm76, %v68, %v80
    %v85 = vsel %vm77, %v69, %v81
    %v86 = vsub.f32 1.0, %v82
    %v87 = vsub.f32 1.0, %v83
    %v88 = vsub.f32 1.0, %v84
    %v89 = vsub.f32 1.0, %v85
    %v90 = vmul.f32 %v86, %v86
    %v91 = vmul.f32 %v87, %v87
    %v92 = vmul.f32 %v88, %v88
    %v93 = vmul.f32 %v89, %v89
    %v94 = vmul.f32 %v90, %v90
    %v95 = vmul.f32 %v91, %v91
    %v96 = vmul.f32 %v92, %v92
    %v97 = vmul.f32 %v93, %v93
    %v98 = vmul.f32 %v86, %v94
    %v99 = vmul.f32 %v87, %v95
    %v100 = vmul.f32 %v88, %v96
    %v101 = vmul.f32 %v89, %v97
    %v102 = vlog2.pop %v82
    %v103 = vmul.f32 %v102, 0.6931472
    %v104 = vlog2.pop %v83
    %v105 = vmul.f32 %v104, 0.6931472
    %v106 = vlog2.pop %v84
    %v107 = vmul.f32 %v106, 0.6931472
    %v108 = vlog2.pop %v85
    %v109 = vmul.f32 %v108, 0.6931472
    %v110 = vmul.f32 %v98, %v103
    %v111 = vmul.f32 %v99, %v105
    %v112 = vmul.f32 %v100, %v107
    %v113 = vmul.f32 %v101, %v109
    %v114 = vadd.f32 %v110, %v111
    %v115 = vadd.f32 %v114, %v112
    %v116 = vadd.f32 %v115, %v113
    %v117 = vadd.f32 %v65, %v116
    %118 = vst [vmem:[#allocation2] sm:$0xff] %v117
    // Predicated region
    $region22: #{tpu_custom_call.1} parent=1 // pred_check
      %p119 = pneg %p60
    $region23: #{tpu_custom_call.1} parent=1 // pred_check_branch
      %121 = sbr.rel (%p119) target = $region25
    $region24: #{tpu_custom_call.1} parent=1 // pred_region
      %v122 = vld [vmem:[#allocation2] sm:$0xff]
      %v123 = vrot.slane %v122, 4
      %v124 = vadd.f32 %v122, %v123
      %v125 = vrot.slane %v124, 2
      %v126 = vadd.f32 %v124, %v125
      %v127 = vrot.slane %v126, 1
      %v128 = vadd.f32 %v126, %v127
      %129 = vst [vmem:[#allocation8] sm:$0x1] %v128
    $region25: #{tpu_custom_call.1} parent=1 // pred_fallthru
      _
    // Predicated region
    $region26: #{tpu_custom_call.1} parent=1 // pred_check
      _
    $region27: #{tpu_custom_call.1} parent=1 // pred_check_branch
      %131 = sbr.rel (0) target = $region29
    $region28: #{tpu_custom_call.1} parent=1 // pred_region
      %s133 = ssub.s32 16, 16
      %134 = vsyncadd [#allocation5], %s133
      %s136 = sshll.u32 [#allocation8], 4
      %s137 = int_to_ptr.vmem [resolvable:$true] %s136
      %139 = dma.vmem_to_hbm [thread:$0]  %s137, 16, %s2, [#allocation5]
    $region29: #{tpu_custom_call.1} parent=1 // pred_fallthru
      _
    // Predicated region
    $region30: #{tpu_custom_call.1} parent=1 // pred_check
      _
    $region31: #{tpu_custom_call.1} parent=1 // pred_check_branch
      %141 = sbr.rel (0) target = $region33
    $region32: #{tpu_custom_call.1} parent=1 // pred_region
      %142 = dma.done [#allocation5], 16
    $region33: #{tpu_custom_call.1} parent=1 // pred_fallthru
      _
    %143 = vsyncpa [#allocation4], 1
    %144 = vsyncpa [#allocation7], 1
    %145 = vsyncpa [#allocation5], 1

</llo_original>
